<compile_context>
chip_gen: v5e
topology: v5e:2x2
jax: 0.10.0
libtpu: 0.0.40
codegen_flags: <defaults>
</compile_context>

<pallas_src>
import math

import jax
import jax.numpy as jnp
from jax.experimental import pallas as pl
from jax.experimental.pallas import tpu as pltpu

_LN_EPS = 1e-5  # PyTorch nn.LayerNorm default


def _round_up(x, m):
    return ((x + m - 1) // m) * m


def _layernorm(x, gamma, beta):
    # Single-pass statistics: var = E[x^2] - E[x]^2 (guarded against tiny
    # negative values from cancellation).  Both lane-reductions are
    # independent, so the XLU can overlap them.
    mu = jnp.mean(x, axis=-1, keepdims=True)
    ms = jnp.mean(x * x, axis=-1, keepdims=True)
    var = jnp.maximum(ms - mu * mu, 0.0)
    return (x - mu) * jax.lax.rsqrt(var + _LN_EPS) * gamma + beta


# ---------------------------------------------------------------------------
# Kernel 1: encoder (Linear -> LayerNorm -> ReLU -> Linear), plus the per-row
# half of the first interaction layer: z = e @ Wz (+ bz).
# ---------------------------------------------------------------------------
def encode_kernel(f_ref, we1_ref, be1_ref, ge_ref, bee_ref, we2_ref, be2_ref,
                  wz_ref, bz_ref, e_ref, z_ref):
    h = jnp.dot(f_ref[...], we1_ref[...],
                preferred_element_type=jnp.float32) + be1_ref[...]
    h = jnp.maximum(_layernorm(h, ge_ref[...], bee_ref[...]), 0.0)
    e = jnp.dot(h.astype(we2_ref.dtype), we2_ref[...],
                preferred_element_type=jnp.float32) + be2_ref[...]
    ec = e.astype(e_ref.dtype)          # compute dtype (bf16 by default)
    e_ref[...] = ec
    z_ref[...] = (jnp.dot(ec, wz_ref[...], preferred_element_type=jnp.float32)
                  + bz_ref[...])


def _encode(f, we1, be1, ge, bee, we2, be2, wz, bz, *, tile, out_dtype,
            vmem_limit):
    bp, d = f.shape
    h = we1.shape[1]
    pinned = lambda i: (0, 0)
    return pl.pallas_call(
        encode_kernel,
        out_shape=(jax.ShapeDtypeStruct((bp, h), out_dtype),
                   jax.ShapeDtypeStruct((bp, h), jnp.float32)),
        grid_spec=pltpu.PrefetchScalarGridSpec(
            num_scalar_prefetch=0,
            grid=(bp // tile,),
            in_specs=[
                pl.BlockSpec((tile, d), lambda i: (i, 0)),   # feature rows
                pl.BlockSpec(we1.shape, pinned),             # weights: resident
                pl.BlockSpec(be1.shape, pinned),
                pl.BlockSpec(ge.shape, pinned),
                pl.BlockSpec(bee.shape, pinned),
                pl.BlockSpec(we2.shape, pinned),
                pl.BlockSpec(be2.shape, pinned),
                pl.BlockSpec(wz.shape, pinned),
                pl.BlockSpec(bz.shape, pinned),
            ],
            out_specs=(pl.BlockSpec((tile, h), lambda i: (i, 0)),
                       pl.BlockSpec((tile, h), lambda i: (i, 0)))),
        compiler_params=pltpu.CompilerParams(
            dimension_semantics=("parallel",),
            vmem_limit_bytes=vmem_limit),
    )(f, we1, be1, ge, bee, we2, be2, wz, bz)


# ---------------------------------------------------------------------------
# Kernel 2: pairwise interaction over a (tB1, tB2) tile of the energy matrix.
# ---------------------------------------------------------------------------
def pair_kernel(e1_ref, z1_ref, e2_ref, z2_ref,
                wi1c_ref, gi_ref, bii_ref, wi2_ref, bi2_ref, wi3_ref, bi3_ref,
                out_ref):
    e1 = e1_ref[...]                       # (tB1, H)  compute dtype
    e2 = e2_ref[...]                       # (tB2, H)  compute dtype
    tb1, hd = e1.shape
    tb2 = e2.shape[0]
    p = tb1 * tb2

    # Only the elementwise-product term needs a pairwise matmul; the e1/e2
    # linear terms (z1/z2) were hoisted into the encoder phase.  The product
    # is formed directly in the storage dtype (bf16 on v6e/v7x).
    inter = (e1[:, None, :] * e2[None, :, :]).reshape(p, hd)
    h = jnp.dot(inter, wi1c_ref[...], preferred_element_type=jnp.float32)

    # Add the per-row / per-column linear terms as broadcasts — no separate
    # [P, H] zsum temporary is materialized.
    h = h.reshape(tb1, tb2, hd) + z1_ref[...][:, None, :] + z2_ref[...][None, :, :]

    h = jnp.maximum(_layernorm(h, gi_ref[...], bii_ref[...]), 0.0)

    h = jnp.dot(h.reshape(p, hd).astype(wi2_ref.dtype), wi2_ref[...],
                preferred_element_type=jnp.float32) + bi2_ref[...]
    h = jnp.maximum(h, 0.0)                # (P, H2p); zero-padded lanes stay 0

    # Final Linear(H/2 -> 1): VPU mul + XLU lane-reduce, emitted lane-dense
    # (tb1, tb2).  (An MXU dot against wi3 would give a [P,1] slab that needs
    # a costly sublane->lane relayout before the lane-dense store.)
    h3 = h.reshape(tb1, tb2, h.shape[-1])
    out_ref[...] = jnp.sum(h3 * wi3_ref[...], axis=-1) + bi3_ref[...]


# ---------------------------------------------------------------------------
# Wrapper
# ---------------------------------------------------------------------------
def energy_net_pallas(f_orig, f_recon, params, *, compute_dtype=jnp.bfloat16,
                      tb1=64, tb2=128, enc_tile=256,
                      vmem_limit_bytes=64 * 1024 * 1024):
    """Returns the [B1, B2] energy matrix (float32).

    compute_dtype: dtype of MXU operands AND of the stored e1/e2 encodings
      (bf16 default; use jnp.float32 on v5e or for a high-precision path).
    tb1/tb2: pair tile.  v6e/v5e can go to tb1=128 with vmem_limit ~96 MiB;
      on v7x (64 MiB VMEM/TC) keep tb1 <= 64 and vmem_limit <= ~48 MiB.
    """
    b1, _ = f_orig.shape
    b2 = f_recon.shape[0]
    h = params["we1"].shape[1]
    h2 = params["wi2"].shape[1]
    h2p = _round_up(h2, 128)               # lane-pad the H/2 stage (exact)

    # Effective pair tiles (shrunk for tiny batches, kept sublane-aligned).
    tb1e = min(tb1, _round_up(b1, 8))
    tb2e = min(tb2, _round_up(b2, 8))
    b1p = _round_up(b1, tb1e)
    b2p = _round_up(b2, tb2e)

    # Encoder row tiles: large (fills the MXU, amortizes grid-step overhead).
    # The encoder may pad further than the pair phase needs; the pair phase
    # simply never reads those extra rows.
    te1 = min(enc_tile, b1p)
    te2 = min(enc_tile, b2p)
    b1e = _round_up(b1p, te1)
    b2e = _round_up(b2p, te2)

    # Cast features once in the wrapper (halves feature DMA bytes for bf16).
    f1 = jnp.pad(f_orig, ((0, b1e - b1), (0, 0))).astype(compute_dtype)
    f2 = jnp.pad(f_recon, ((0, b2e - b2), (0, 0))).astype(compute_dtype)

    # Split the [3H, H] interaction weight into its three H x H pieces.
    wi1 = params["wi1"]
    wi1a, wi1b, wi1c = wi1[:h], wi1[h:2 * h], wi1[2 * h:]

    # Cast MXU-operand weights once (halves weight DMA bytes for bf16).
    we1 = params["we1"].astype(compute_dtype)
    we2 = params["we2"].astype(compute_dtype)
    wi1a = wi1a.astype(compute_dtype)
    wi1b = wi1b.astype(compute_dtype)
    wi1c = wi1c.astype(compute_dtype)
    wi2 = jnp.pad(params["wi2"], ((0, 0), (0, h2p - h2))).astype(compute_dtype)
    bi2 = jnp.pad(params["bi2"], ((0, 0), (0, h2p - h2)))
    wi3 = jnp.pad(params["wi3"], ((0, 0), (0, h2p - h2)))
    zeros_h = jnp.zeros((1, h), jnp.float32)

    # Phase 1: encode each feature set once; z1 carries bi1, z2 does not
    # (so the interaction bias is added exactly once).
    e1, z1 = _encode(f1, we1, params["be1"], params["ge"], params["bee"],
                     we2, params["be2"], wi1a, params["bi1"],
                     tile=te1, out_dtype=compute_dtype,
                     vmem_limit=vmem_limit_bytes)
    e2, z2 = _encode(f2, we1, params["be1"], params["ge"], params["bee"],
                     we2, params["be2"], wi1b, zeros_h,
                     tile=te2, out_dtype=compute_dtype,
                     vmem_limit=vmem_limit_bytes)

    # Phase 2: pairwise interaction.  Grid = (j over B2, i over B1); i is the
    # inner (fast) axis so the bigger e2/z2 tiles stay VMEM-resident across
    # it and only the small e1/z1 tiles are re-streamed.
    pinned = lambda j, i: (0, 0)
    out = pl.pallas_call(
        pair_kernel,
        out_shape=jax.ShapeDtypeStruct((b1p, b2p), jnp.float32),
        grid_spec=pltpu.PrefetchScalarGridSpec(
            num_scalar_prefetch=0,
            grid=(b2p // tb2e, b1p // tb1e),
            in_specs=[
                pl.BlockSpec((tb1e, h), lambda j, i: (i, 0)),   # e1 tile
                pl.BlockSpec((tb1e, h), lambda j, i: (i, 0)),   # z1 tile
                pl.BlockSpec((tb2e, h), lambda j, i: (j, 0)),   # e2 tile
                pl.BlockSpec((tb2e, h), lambda j, i: (j, 0)),   # z2 tile
                pl.BlockSpec((h, h), pinned),                   # wi1c (resident)
                pl.BlockSpec((1, h), pinned),                   # gi
                pl.BlockSpec((1, h), pinned),                   # bii
                pl.BlockSpec((h, h2p), pinned),                 # wi2 (lane-padded)
                pl.BlockSpec((1, h2p), pinned),                 # bi2
                pl.BlockSpec((1, h2p), pinned),                 # wi3
                pl.BlockSpec((1, 1), pinned),                   # bi3
            ],
            out_specs=pl.BlockSpec((tb1e, tb2e), lambda j, i: (i, j))),
        compiler_params=pltpu.CompilerParams(
            dimension_semantics=("parallel", "parallel"),
            vmem_limit_bytes=vmem_limit_bytes),
    )(e1, z1, e2, z2, wi1c, params["gi"], params["bii"], wi2, bi2, wi3,
      params["bi3"])

    return out[:b1, :b2]


# ---------------------------------------------------------------------------
# Pure-JAX reference (mirrors the PyTorch forward; full f32 precision)
# ---------------------------------------------------------------------------
def energy_net_ref(f_orig, f_recon, p):
    hi = jax.lax.Precision.HIGHEST

    def ln(x, g, bt):
        mu = x.mean(-1, keepdims=True)
        var = ((x - mu) ** 2).mean(-1, keepdims=True)
        return (x - mu) / jnp.sqrt(var + _LN_EPS) * g + bt

    def encode(x):
        h = jnp.dot(x, p["we1"], precision=hi) + p["be1"]
        h = jnp.maximum(ln(h, p["ge"], p["bee"]), 0.0)
        return jnp.dot(h, p["we2"], precision=hi) + p["be2"]

    e1, e2 = encode(f_orig), encode(f_recon)
    b1, b2, hd = f_orig.shape[0], f_recon.shape[0], e1.shape[1]
    e1e = jnp.broadcast_to(e1[:, None, :], (b1, b2, hd))
    e2e = jnp.broadcast_to(e2[None, :, :], (b1, b2, hd))
    comb = jnp.concatenate([e1e, e2e, e1e * e2e], axis=-1)

    h = jnp.dot(comb, p["wi1"], precision=hi) + p["bi1"]
    h = jnp.maximum(ln(h, p["gi"], p["bii"]), 0.0)
    h = jnp.maximum(jnp.dot(h, p["wi2"], precision=hi) + p["bi2"], 0.0)
    return jnp.sum(h * p["wi3"], axis=-1) + p["bi3"][0, 0]   # Linear(H/2 -> 1)


def make_params(key, feature_dim, hidden_dim):
    d, h = feature_dim, hidden_dim
    ks = jax.random.split(key, 10)

    def lin(k, fan_in, shape):
        return jax.random.normal(k, shape, jnp.float32) / math.sqrt(fan_in)

    return {
        # encoder (weights stored [in, out]; biases [1, out])
        "we1": lin(ks[0], d, (d, h)),
        "be1": lin(ks[1], d, (1, h)),
        "ge": jnp.ones((1, h), jnp.float32),    # LayerNorm affine (PyTorch init)
        "bee": jnp.zeros((1, h), jnp.float32),
        "we2": lin(ks[2], h, (h, h)),
        "be2": lin(ks[3], h, (1, h)),
        # interaction
        "wi1": lin(ks[4], 3 * h, (3 * h, h)),
        "bi1": lin(ks[5], 3 * h, (1, h)),
        "gi": jnp.ones((1, h), jnp.float32),
        "bii": jnp.zeros((1, h), jnp.float32),
        "wi2": lin(ks[6], h, (h, h // 2)),
        "bi2": lin(ks[7], h, (1, h // 2)),
        "wi3": lin(ks[8], h // 2, (1, h // 2)),  # stored [1, H/2]
        "bi3": lin(ks[9], h // 2, (1, 1)),
    }


if __name__ == "__main__":
    D, H = 64, 128          # feature_dim, hidden_dim (H lane-aligned)
    B1, B2 = 8, 16

    key = jax.random.PRNGKey(0)
    kp, k1, k2 = jax.random.split(key, 3)
    params = make_params(kp, D, H)
    f_orig = jax.random.normal(k1, (B1, D), jnp.float32)
    f_recon = jax.random.normal(k2, (B2, D), jnp.float32)

    ref = energy_net_ref(f_orig, f_recon, params)

    # f32 MXU / f32 intermediates path.
    out_f32 = jax.block_until_ready(
        energy_net_pallas(f_orig, f_recon, params, compute_dtype=jnp.float32))
    assert out_f32.shape == (B1, B2)
    err32 = jnp.max(jnp.abs(out_f32 - ref))
    assert jnp.allclose(out_f32, ref, rtol=3e-2, atol=3e-2), (
        f"f32 max abs diff = {err32}")

    # bf16 path (default; preferred on v6e/v7x): loose check vs f32 reference.
    out_bf16 = jax.block_until_ready(energy_net_pallas(f_orig, f_recon, params))
    assert out_bf16.shape == (B1, B2)
    err16 = jnp.max(jnp.abs(out_bf16 - ref))
    assert jnp.allclose(out_bf16, ref, rtol=8e-2, atol=8e-2), (
        f"bf16 max abs diff = {err16}")

    print("KERNEL_OK")
</pallas_src>

<mosaic_0001>
module attributes {stable_mosaic.version = 11 : i64} {
  func.func @encode_kernel(%arg0: i32, %arg1: memref<8x64xf32, #tpu.memory_space<vmem>>, %arg2: memref<64x128xf32, #tpu.memory_space<vmem>>, %arg3: memref<1x128xf32, #tpu.memory_space<vmem>>, %arg4: memref<1x128xf32, #tpu.memory_space<vmem>>, %arg5: memref<1x128xf32, #tpu.memory_space<vmem>>, %arg6: memref<128x128xf32, #tpu.memory_space<vmem>>, %arg7: memref<1x128xf32, #tpu.memory_space<vmem>>, %arg8: memref<128x128xf32, #tpu.memory_space<vmem>>, %arg9: memref<1x128xf32, #tpu.memory_space<vmem>>, %arg10: memref<8x128xf32, #tpu.memory_space<vmem>>, %arg11: memref<8x128xf32, #tpu.memory_space<vmem>>) attributes {dimension_semantics = [#tpu.dimension_semantics<parallel>], iteration_bounds = array<i64: 1>, scalar_prefetch = 0 : i64, scratch_operands = 0 : i64, tpu.core_type = #tpu.core_type<tc>, window_params = [{transform_indices = @transform_0, window_bounds = array<i64: 8, 64>}, {pipeline_mode = #tpu.pipeline_mode<synchronous>, transform_indices = @transform_1, window_bounds = array<i64: 64, 128>}, {pipeline_mode = #tpu.pipeline_mode<synchronous>, transform_indices = @transform_2, window_bounds = array<i64: 1, 128>}, {pipeline_mode = #tpu.pipeline_mode<synchronous>, transform_indices = @transform_3, window_bounds = array<i64: 1, 128>}, {pipeline_mode = #tpu.pipeline_mode<synchronous>, transform_indices = @transform_4, window_bounds = array<i64: 1, 128>}, {pipeline_mode = #tpu.pipeline_mode<synchronous>, transform_indices = @transform_5, window_bounds = array<i64: 128, 128>}, {pipeline_mode = #tpu.pipeline_mode<synchronous>, transform_indices = @transform_6, window_bounds = array<i64: 1, 128>}, {pipeline_mode = #tpu.pipeline_mode<synchronous>, transform_indices = @transform_7, window_bounds = array<i64: 128, 128>}, {pipeline_mode = #tpu.pipeline_mode<synchronous>, transform_indices = @transform_8, window_bounds = array<i64: 1, 128>}, {transform_indices = @transform_9, window_bounds = array<i64: 8, 128>}, {transform_indices = @transform_10, window_bounds = array<i64: 8, 128>}]} {
    %c0 = arith.constant 0 : index
    %c0_0 = arith.constant 0 : index
    %0 = vector.load %arg1[%c0, %c0_0] : memref<8x64xf32, #tpu.memory_space<vmem>>, vector<8x64xf32>
    %c0_1 = arith.constant 0 : index
    %c0_2 = arith.constant 0 : index
    %1 = vector.load %arg2[%c0_1, %c0_2] : memref<64x128xf32, #tpu.memory_space<vmem>>, vector<64x128xf32>
    %cst = arith.constant dense<0.000000e+00> : vector<8x128xf32>
    %2 = tpu.matmul %0, %1, %cst {dimension_numbers = #tpu.dot_dimension_numbers<[1], [0], [0], [1], [0, 0, 1, 1], [], []>} : vector<8x64xf32>, vector<64x128xf32>, vector<8x128xf32> -> vector<8x128xf32>
    %c0_3 = arith.constant 0 : index
    %c0_4 = arith.constant 0 : index
    %3 = vector.load %arg3[%c0_3, %c0_4] : memref<1x128xf32, #tpu.memory_space<vmem>>, vector<1x128xf32>
    %4 = vector.broadcast %3 : vector<1x128xf32> to vector<8x128xf32>
    %5 = arith.addf %2, %4 : vector<8x128xf32>
    %c0_5 = arith.constant 0 : index
    %c0_6 = arith.constant 0 : index
    %6 = vector.load %arg4[%c0_5, %c0_6] : memref<1x128xf32, #tpu.memory_space<vmem>>, vector<1x128xf32>
    %c0_7 = arith.constant 0 : index
    %c0_8 = arith.constant 0 : index
    %7 = vector.load %arg5[%c0_7, %c0_8] : memref<1x128xf32, #tpu.memory_space<vmem>>, vector<1x128xf32>
    %cst_9 = arith.constant dense<0.000000e+00> : vector<8xf32>
    %8 = vector.multi_reduction <add>, %5, %cst_9 [1] : vector<8x128xf32> to vector<8xf32>
    %9 = vector.shape_cast %8 : vector<8xf32> to vector<8x1xf32>
    %cst_10 = arith.constant 1.280000e+02 : f32
    %10 = vector.broadcast %cst_10 : f32 to vector<8x1xf32>
    %11 = arith.divf %9, %10 : vector<8x1xf32>
    %12 = arith.mulf %5, %5 : vector<8x128xf32>
    %cst_11 = arith.constant dense<0.000000e+00> : vector<8xf32>
    %13 = vector.multi_reduction <add>, %12, %cst_11 [1] : vector<8x128xf32> to vector<8xf32>
    %14 = vector.shape_cast %13 : vector<8xf32> to vector<8x1xf32>
    %cst_12 = arith.constant 1.280000e+02 : f32
    %15 = vector.broadcast %cst_12 : f32 to vector<8x1xf32>
    %16 = arith.divf %14, %15 : vector<8x1xf32>
    %17 = arith.mulf %11, %11 : vector<8x1xf32>
    %18 = arith.subf %16, %17 : vector<8x1xf32>
    %cst_13 = arith.constant 0.000000e+00 : f32
    %19 = vector.broadcast %cst_13 : f32 to vector<8x1xf32>
    %20 = arith.maximumf %18, %19 : vector<8x1xf32>
    %21 = vector.broadcast %11 : vector<8x1xf32> to vector<8x128xf32>
    %22 = arith.subf %5, %21 : vector<8x128xf32>
    %cst_14 = arith.constant 9.99999974E-6 : f32
    %23 = vector.broadcast %cst_14 : f32 to vector<8x1xf32>
    %24 = arith.addf %20, %23 : vector<8x1xf32>
    %25 = math.rsqrt %24 : vector<8x1xf32>
    %26 = vector.broadcast %25 : vector<8x1xf32> to vector<8x128xf32>
    %27 = arith.mulf %22, %26 : vector<8x128xf32>
    %28 = vector.broadcast %6 : vector<1x128xf32> to vector<8x128xf32>
    %29 = arith.mulf %27, %28 : vector<8x128xf32>
    %30 = vector.broadcast %7 : vector<1x128xf32> to vector<8x128xf32>
    %31 = arith.addf %29, %30 : vector<8x128xf32>
    %cst_15 = arith.constant 0.000000e+00 : f32
    %32 = vector.broadcast %cst_15 : f32 to vector<8x128xf32>
    %33 = arith.maximumf %31, %32 : vector<8x128xf32>
    %c0_16 = arith.constant 0 : index
    %c0_17 = arith.constant 0 : index
    %34 = vector.load %arg6[%c0_16, %c0_17] : memref<128x128xf32, #tpu.memory_space<vmem>>, vector<128x128xf32>
    %cst_18 = arith.constant dense<0.000000e+00> : vector<8x128xf32>
    %35 = tpu.matmul %33, %34, %cst_18 {dimension_numbers = #tpu.dot_dimension_numbers<[1], [0], [0], [1], [0, 0, 1, 1], [], []>} : vector<8x128xf32>, vector<128x128xf32>, vector<8x128xf32> -> vector<8x128xf32>
    %c0_19 = arith.constant 0 : index
    %c0_20 = arith.constant 0 : index
    %36 = vector.load %arg7[%c0_19, %c0_20] : memref<1x128xf32, #tpu.memory_space<vmem>>, vector<1x128xf32>
    %37 = vector.broadcast %36 : vector<1x128xf32> to vector<8x128xf32>
    %38 = arith.addf %35, %37 : vector<8x128xf32>
    %c0_21 = arith.constant 0 : index
    %c0_22 = arith.constant 0 : index
    %39 = vector.load %arg10[%c0_21, %c0_22] : memref<8x128xf32, #tpu.memory_space<vmem>>, vector<8x128xf32>
    tpu.vector_store %arg10[%c0_21, %c0_22], %38 {strides = array<i32>} : memref<8x128xf32, #tpu.memory_space<vmem>>, vector<8x128xf32>,
    %c0_23 = arith.constant 0 : index
    %c0_24 = arith.constant 0 : index
    %40 = vector.load %arg8[%c0_23, %c0_24] : memref<128x128xf32, #tpu.memory_space<vmem>>, vector<128x128xf32>
    %cst_25 = arith.constant dense<0.000000e+00> : vector<8x128xf32>
    %41 = tpu.matmul %38, %40, %cst_25 {dimension_numbers = #tpu.dot_dimension_numbers<[1], [0], [0], [1], [0, 0, 1, 1], [], []>} : vector<8x128xf32>, vector<128x128xf32>, vector<8x128xf32> -> vector<8x128xf32>
    %c0_26 = arith.constant 0 : index
    %c0_27 = arith.constant 0 : index
    %42 = vector.load %arg9[%c0_26, %c0_27] : memref<1x128xf32, #tpu.memory_space<vmem>>, vector<1x128xf32>
    %43 = vector.broadcast %42 : vector<1x128xf32> to vector<8x128xf32>
    %44 = arith.addf %41, %43 : vector<8x128xf32>
    %c0_28 = arith.constant 0 : index
    %c0_29 = arith.constant 0 : index
    %45 = vector.load %arg11[%c0_28, %c0_29] : memref<8x128xf32, #tpu.memory_space<vmem>>, vector<8x128xf32>
    tpu.vector_store %arg11[%c0_28, %c0_29], %44 {strides = array<i32>} : memref<8x128xf32, #tpu.memory_space<vmem>>, vector<8x128xf32>,
    return
  }
  func.func @transform_0(%arg0: i32) -> (i32, i32) {
    %c0_i32 = arith.constant 0 : i32
    %c0_i32_0 = arith.constant 0 : i32
    return %arg0, %c0_i32 : i32, i32
  }
  func.func @transform_1(%arg0: i32) -> (i32, i32) {
    %c0_i32 = arith.constant 0 : i32
    %c0_i32_0 = arith.constant 0 : i32
    %c0_i32_1 = arith.constant 0 : i32
    return %c0_i32, %c0_i32_0 : i32, i32
  }
  func.func @transform_2(%arg0: i32) -> (i32, i32) {
    %c0_i32 = arith.constant 0 : i32
    %c0_i32_0 = arith.constant 0 : i32
    %c0_i32_1 = arith.constant 0 : i32
    return %c0_i32, %c0_i32_0 : i32, i32
  }
  func.func @transform_3(%arg0: i32) -> (i32, i32) {
    %c0_i32 = arith.constant 0 : i32
    %c0_i32_0 = arith.constant 0 : i32
    %c0_i32_1 = arith.constant 0 : i32
    return %c0_i32, %c0_i32_0 : i32, i32
  }
  func.func @transform_4(%arg0: i32) -> (i32, i32) {
    %c0_i32 = arith.constant 0 : i32
    %c0_i32_0 = arith.constant 0 : i32
    %c0_i32_1 = arith.constant 0 : i32
    return %c0_i32, %c0_i32_0 : i32, i32
  }
  func.func @transform_5(%arg0: i32) -> (i32, i32) {
    %c0_i32 = arith.constant 0 : i32
    %c0_i32_0 = arith.constant 0 : i32
    %c0_i32_1 = arith.constant 0 : i32
    return %c0_i32, %c0_i32_0 : i32, i32
  }
  func.func @transform_6(%arg0: i32) -> (i32, i32) {
    %c0_i32 = arith.constant 0 : i32
    %c0_i32_0 = arith.constant 0 : i32
    %c0_i32_1 = arith.constant 0 : i32
    return %c0_i32, %c0_i32_0 : i32, i32
  }
  func.func @transform_7(%arg0: i32) -> (i32, i32) {
    %c0_i32 = arith.constant 0 : i32
    %c0_i32_0 = arith.constant 0 : i32
    %c0_i32_1 = arith.constant 0 : i32
    return %c0_i32, %c0_i32_0 : i32, i32
  }
  func.func @transform_8(%arg0: i32) -> (i32, i32) {
    %c0_i32 = arith.constant 0 : i32
    %c0_i32_0 = arith.constant 0 : i32
    %c0_i32_1 = arith.constant 0 : i32
    return %c0_i32, %c0_i32_0 : i32, i32
  }
  func.func @transform_9(%arg0: i32) -> (i32, i32) {
    %c0_i32 = arith.constant 0 : i32
    %c0_i32_0 = arith.constant 0 : i32
    return %arg0, %c0_i32 : i32, i32
  }
  func.func @transform_10(%arg0: i32) -> (i32, i32) {
    %c0_i32 = arith.constant 0 : i32
    %c0_i32_0 = arith.constant 0 : i32
    return %arg0, %c0_i32 : i32, i32
  }
}

</mosaic_0001>

<llo_original>
// kernel: tpu_custom_call.1
$region0: #{tpu_custom_call.1}
  #allocation0 [shape = 'u32[]', space=smem, size = 0x4, offset = 0x4, fixed_abs, tag = 'smem constant byte address 0x4 - core index']
  #allocation1 [shape = 'u32[72,128]{1,0:T(1,128)}', space=vmem, size = 0x9000, scoped, tag = 'internal scratch']
  %s0 = inlined_call_operand.hbm [shape: f32[8,64], index: 0, kind: input, shape index: {}]
  %s1 = inlined_call_operand.hbm [shape: f32[64,128], index: 1, kind: input, shape index: {}]
  %s2 = inlined_call_operand.vmem [shape: f32[1,128], index: 2, kind: input, shape index: {}]
  %s3 = inlined_call_operand.vmem [shape: f32[1,128], index: 3, kind: input, shape index: {}]
  %s4 = inlined_call_operand.vmem [shape: f32[1,128], index: 4, kind: input, shape index: {}]
  %s5 = inlined_call_operand.hbm [shape: f32[128,128], index: 5, kind: input, shape index: {}]
  %s6 = inlined_call_operand.vmem [shape: f32[1,128], index: 6, kind: input, shape index: {}]
  %s7 = inlined_call_operand.hbm [shape: f32[128,128], index: 7, kind: input, shape index: {}]
  %s8 = inlined_call_operand.vmem [shape: f32[1,128], index: 8, kind: input, shape index: {}]
  %s9 = inlined_call_operand.hbm [shape: f32[8,128], index: 9, kind: output, shape index: {0}]
  %s10 = inlined_call_operand.hbm [shape: f32[8,128], index: 10, kind: output, shape index: {1}]
  %11 = xla_tuple %s9, %s10
  %s12 = sld [smem:[#allocation0]]
  $region70: #{tpu_custom_call.1} parent=0
    _
  %s14 = ssub.s32 1, %s12
  %s15 = scalar_select 0, %s14, %s12
  $region1: #{tpu_custom_call.1} parent=0
    #allocation2 [shape = 'u8[4096]{0}', space=vmem, size = 0x1000, scoped, tag = 'input window, operand 0, single buffered']
    #allocation3 [shape = 's32[1]{0}', space=sflag, size = 0x4, scoped, tag = 'scoped memory for tpu_custom_call.1']
    #allocation4 [shape = 's32[1]{0}', space=sflag, size = 0x4, scoped, tag = 'scoped memory for tpu_custom_call.1']
    #allocation5 [shape = 'u8[32768]{0}', space=vmem, size = 0x8000, scoped, tag = 'input window, operand 1, single buffered']
    #allocation6 [shape = 's32[1]{0}', space=sflag, size = 0x4, scoped, tag = 'scoped memory for tpu_custom_call.1']
    #allocation7 [shape = 'u8[65536]{0}', space=vmem, size = 0x10000, scoped, tag = 'input window, operand 5, single buffered']
    #allocation8 [shape = 'u8[65536]{0}', space=vmem, size = 0x10000, scoped, tag = 'input window, operand 7, single buffered']
    #allocation9 [shape = 's32[1]{0}', space=sflag, size = 0x4, scoped, tag = 'scoped memory for tpu_custom_call.1']
    #allocation10 [shape = 'u8[4096]{0}', space=vmem, size = 0x1000, scoped, tag = 'output window, operand 0, single buffered']
    #allocation11 [shape = 'u8[4096]{0}', space=vmem, size = 0x1000, scoped, tag = 'output window, operand 1, single buffered']
    #allocation12 [shape = 's32[1]{0}', space=sflag, size = 0x4, scoped, tag = 'scoped memory for tpu_custom_call.1']
    %16 = vsyncpa [#allocation3], 0
    %17 = vsyncpa [#allocation6], 0
    %18 = vsyncpa [#allocation9], 0
    %19 = vsyncpa [#allocation4], 0
    %20 = vsyncpa [#allocation12], 0
    // Predicated region
    $region2: #{tpu_custom_call.1} parent=1 // pred_check
      _
    $region3: #{tpu_custom_call.1} parent=1 // pred_check_branch
      %22 = sbr.rel (0) target = $region5
    $region4: #{tpu_custom_call.1} parent=1 // pred_region
      %24 = vsyncadd [#allocation3], 0
      %s26 = sshll.u32 %s0, 4
      %s27 = int_to_ptr.hbm [resolvable:$true] %s26
      %s28 = sshll.u32 [#allocation2], 4
      %s29 = int_to_ptr.vmem [resolvable:$true] %s28
      %31 = dma.hbm_to_vmem [thread:$0]  %s27, 128, %s29, [#allocation3]
    $region5: #{tpu_custom_call.1} parent=1 // pred_fallthru
      _
    // Predicated region
    $region6: #{tpu_custom_call.1} parent=1 // pred_check
      _
    $region7: #{tpu_custom_call.1} parent=1 // pred_check_branch
      %33 = sbr.rel (0) target = $region9
    $region8: #{tpu_custom_call.1} parent=1 // pred_region
      %35 = vsyncadd [#allocation6], 0
      %s36 = sshll.u32 %s1, 4
      %s37 = int_to_ptr.hbm [resolvable:$true] %s36
      %s38 = sshll.u32 [#allocation5], 4
      %s39 = int_to_ptr.vmem [resolvable:$true] %s38
      %44 = dma.hbm_to_vmem [thread:$0]  %s37, 1024, %s39, [#allocation6], 128, 128, 8
    $region9: #{tpu_custom_call.1} parent=1 // pred_fallthru
      _
    // Predicated region
    $region10: #{tpu_custom_call.1} parent=1 // pred_check
      _
    $region11: #{tpu_custom_call.1} parent=1 // pred_check_branch
      %46 = sbr.rel (0) target = $region13
    $region12: #{tpu_custom_call.1} parent=1 // pred_region
      _
    $region13: #{tpu_custom_call.1} parent=1 // pred_fallthru
      _
    // Predicated region
    $region14: #{tpu_custom_call.1} parent=1 // pred_check
      _
    $region15: #{tpu_custom_call.1} parent=1 // pred_check_branch
      %48 = sbr.rel (0) target = $region17
    $region16: #{tpu_custom_call.1} parent=1 // pred_region
      _
    $region17: #{tpu_custom_call.1} parent=1 // pred_fallthru
      _
    // Predicated region
    $region18: #{tpu_custom_call.1} parent=1 // pred_check
      _
    $region19: #{tpu_custom_call.1} parent=1 // pred_check_branch
      %50 = sbr.rel (0) target = $region21
    $region20: #{tpu_custom_call.1} parent=1 // pred_region
      _
    $region21: #{tpu_custom_call.1} parent=1 // pred_fallthru
      _
    // Predicated region
    $region22: #{tpu_custom_call.1} parent=1 // pred_check
      _
    $region23: #{tpu_custom_call.1} parent=1 // pred_check_branch
      %52 = sbr.rel (0) target = $region25
    $region24: #{tpu_custom_call.1} parent=1 // pred_region
      %54 = vsyncadd [#allocation6], 0
      %s55 = sshll.u32 %s5, 4
      %s56 = int_to_ptr.hbm [resolvable:$true] %s55
      %s57 = sshll.u32 [#allocation7], 4
      %s58 = int_to_ptr.vmem [resolvable:$true] %s57
      %63 = dma.hbm_to_vmem [thread:$0]  %s56, 2048, %s58, [#allocation6], 128, 128, 8
    $region25: #{tpu_custom_call.1} parent=1 // pred_fallthru
      _
    // Predicated region
    $region26: #{tpu_custom_call.1} parent=1 // pred_check
      _
    $region27: #{tpu_custom_call.1} parent=1 // pred_check_branch
      %65 = sbr.rel (0) target = $region29
    $region28: #{tpu_custom_call.1} parent=1 // pred_region
      _
    $region29: #{tpu_custom_call.1} parent=1 // pred_fallthru
      _
    // Predicated region
    $region30: #{tpu_custom_call.1} parent=1 // pred_check
      _
    $region31: #{tpu_custom_call.1} parent=1 // pred_check_branch
      %67 = sbr.rel (0) target = $region33
    $region32: #{tpu_custom_call.1} parent=1 // pred_region
      %69 = vsyncadd [#allocation9], 0
      %s70 = sshll.u32 %s7, 4
      %s71 = int_to_ptr.hbm [resolvable:$true] %s70
      %s72 = sshll.u32 [#allocation8], 4
      %s73 = int_to_ptr.vmem [resolvable:$true] %s72
      %78 = dma.hbm_to_vmem [thread:$0]  %s71, 2048, %s73, [#allocation9], 128, 128, 8
    $region33: #{tpu_custom_call.1} parent=1 // pred_fallthru
      _
    // Predicated region
    $region34: #{tpu_custom_call.1} parent=1 // pred_check
      _
    $region35: #{tpu_custom_call.1} parent=1 // pred_check_branch
      %80 = sbr.rel (0) target = $region37
    $region36: #{tpu_custom_call.1} parent=1 // pred_region
      _
    $region37: #{tpu_custom_call.1} parent=1 // pred_fallthru
      _
    // Predicated region
    $region38: #{tpu_custom_call.1} parent=1 // pred_check
      _
    $region39: #{tpu_custom_call.1} parent=1 // pred_check_branch
      %82 = sbr.rel (0) target = $region41
    $region40: #{tpu_custom_call.1} parent=1 // pred_region
      %84 = dma.done [#allocation3], 128
    $region41: #{tpu_custom_call.1} parent=1 // pred_fallthru
      _
    // Predicated region
    $region42: #{tpu_custom_call.1} parent=1 // pred_check
      _
    $region43: #{tpu_custom_call.1} parent=1 // pred_check_branch
      %86 = sbr.rel (0) target = $region45
    $region44: #{tpu_custom_call.1} parent=1 // pred_region
      %88 = dma.done [#allocation6], 1024
    $region45: #{tpu_custom_call.1} parent=1 // pred_fallthru
      _
    // Predicated region
    $region46: #{tpu_custom_call.1} parent=1 // pred_check
      _
    $region47: #{tpu_custom_call.1} parent=1 // pred_check_branch
      %90 = sbr.rel (0) target = $region49
    $region48: #{tpu_custom_call.1} parent=1 // pred_region
      %92 = dma.done [#allocation6], 2048
    $region49: #{tpu_custom_call.1} parent=1 // pred_fallthru
      _
    // Predicated region
    $region50: #{tpu_custom_call.1} parent=1 // pred_check
      _
    $region51: #{tpu_custom_call.1} parent=1 // pred_check_branch
      %94 = sbr.rel (0) target = $region53
    $region52: #{tpu_custom_call.1} parent=1 // pred_region
      %96 = dma.done [#allocation9], 2048
    $region53: #{tpu_custom_call.1} parent=1 // pred_fallthru
      _
    %v97 = vld [vmem:[#allocation2] sm:$0xff]
    %v98 = vld [vmem:[#allocation5] sm:$0xff]
    %v99 = vld [vmem:[#allocation5 + $0x8] sm:$0xff]
    %v100 = vld [vmem:[#allocation5 + $0x10] sm:$0xff]
    %v101 = vld [vmem:[#allocation5 + $0x18] sm:$0xff]
    %v102 = vld [vmem:[#allocation5 + $0x20] sm:$0xff]
    %v103 = vld [vmem:[#allocation5 + $0x28] sm:$0xff]
    %v104 = vld [vmem:[#allocation5 + $0x30] sm:$0xff]
    %v105 = vld [vmem:[#allocation5 + $0x38] sm:$0xff]
    %v106 = vld [vmem:[%s2] sm:$0x1]
    %v108 = vperm.slane %v106, 0
    %vm110 = vcmask 523264
    %v112 = vsel %vm110, %v97, 0
    %114 = vmatpush.msra.mxu0 0.0
    %115 = vmatpush.msra.mxu0 0.0
    %116 = vmatpush.msra.mxu0 0.0
    %117 = vmatpush.msra.mxu0 0.0
    %118 = vmatpush.msra.mxu0 0.0
    %119 = vmatpush.msra.mxu0 0.0
    %120 = vmatpush.msra.mxu0 0.0
    %121 = vmatpush.msra.mxu0 0.0
    %122 = vmatpush.msra.mxu0 %v105
    %123 = vmatpush.msra.mxu0 %v104
    %124 = vmatpush.msra.mxu0 %v103
    %125 = vmatpush.msra.mxu0 %v102
    %126 = vmatpush.msra.mxu0 %v101
    %127 = vmatpush.msra.mxu0 %v100
    %128 = vmatpush.msra.mxu0 %v99
    %129 = vmatpush.msra.mxu0 %v98
    %130 = vmatmul.f32.gmra.mxu0 %v112
    %v131 = vpop.f32.mrf.mxu0
    %v132 = vadd.f32 %v108, %v131
    %133 = vdwg.mxu0
    %v134 = vld [vmem:[%s3] sm:$0x1]
    %v135 = vld [vmem:[%s4] sm:$0x1]
    %136 = vadd.xlane.f32.xlu0 %v132
    %v137 = vpop.xlane.xlu0 %136
    %v138 = vrcp.pop 128.0
    %v139 = vmul.f32 128.0, %v138
    %v140 = vsub.f32 1.0, %v139
    %v141 = vmul.f32 %v138, %v140
    %v142 = vadd.f32 %v138, %v141
    %vm143 = vweird.f32 %v138
    %v144 = vsel %vm143, %v138, %v142
    %v145 = vmul.f32 %v137, %v144
    %v146 = vmul.f32 %v132, %v132
    %147 = vadd.xlane.f32.xlu0 %v146
    %v148 = vpop.xlane.xlu0 %147
    %v149 = vmul.f32 %v148, %v144
    %v150 = vmul.f32 %v145, %v145
    %v151 = vsub.f32 %v149, %v150
    %v152 = vmax.f32 %v151, 0.0
    %v153 = vsub.f32 %v132, %v145
    %v154 = vadd.f32 %v152, 1e-05
    %v155 = vrsqrt.pop %v154
    %v156 = vmul.f32 %v155, %v154
    %v157 = vmul.f32 %v156, %v155
    %v158 = vmul.f32 0.5, %v157
    %v159 = vsub.f32 1.5, %v158
    %v160 = vmul.f32 %v155, %v159
    %vm161 = vweird.f32 %v154
    %vm162 = vweird.f32 %v155
    %vm163 = vmor %vm161, %vm162
    %v164 = vsel %vm163, %v155, %v160
    %v165 = vmul.f32 %v153, %v164
    %v167 = vperm.slane %v134, 0
    %v169 = vmul.f32 %v165, %v167
    %v171 = vperm.slane %v135, 0
    %v173 = vadd.f32 %v169, %v171
    %v174 = vmax.f32 %v173, 0.0
    %v175 = vld [vmem:[#allocation7] sm:$0xff]
    %v176 = vld [vmem:[#allocation7 + $0x8] sm:$0xff]
    %v177 = vld [vmem:[#allocation7 + $0x10] sm:$0xff]
    %v178 = vld [vmem:[#allocation7 + $0x18] sm:$0xff]
    %v179 = vld [vmem:[#allocation7 + $0x20] sm:$0xff]
    %v180 = vld [vmem:[#allocation7 + $0x28] sm:$0xff]
    %v181 = vld [vmem:[#allocation7 + $0x30] sm:$0xff]
    %v182 = vld [vmem:[#allocation7 + $0x38] sm:$0xff]
    %v183 = vld [vmem:[#allocation7 + $0x40] sm:$0xff]
    %v184 = vld [vmem:[#allocation7 + $0x48] sm:$0xff]
    %v185 = vld [vmem:[#allocation7 + $0x50] sm:$0xff]
    %v186 = vld [vmem:[#allocation7 + $0x58] sm:$0xff]
    %v187 = vld [vmem:[#allocation7 + $0x60] sm:$0xff]
    %v188 = vld [vmem:[#allocation7 + $0x68] sm:$0xff]
    %v189 = vld [vmem:[#allocation7 + $0x70] sm:$0xff]
    %v190 = vld [vmem:[#allocation7 + $0x78] sm:$0xff]
    %v191 = vld [vmem:[%s6] sm:$0x1]
    %v193 = vperm.slane %v191, 0
    %195 = vmatpush.msra.mxu0 %v190
    %196 = vmatpush.msra.mxu0 %v189
    %197 = vmatpush.msra.mxu0 %v188
    %198 = vmatpush.msra.mxu0 %v187
    %199 = vmatpush.msra.mxu0 %v186
    %200 = vmatpush.msra.mxu0 %v185
    %201 = vmatpush.msra.mxu0 %v184
    %202 = vmatpush.msra.mxu0 %v183
    %203 = vmatpush.msra.mxu0 %v182
    %204 = vmatpush.msra.mxu0 %v181
    %205 = vmatpush.msra.mxu0 %v180
    %206 = vmatpush.msra.mxu0 %v179
    %207 = vmatpush.msra.mxu0 %v178
    %208 = vmatpush.msra.mxu0 %v177
    %209 = vmatpush.msra.mxu0 %v176
    %210 = vmatpush.msra.mxu0 %v175
    %211 = vmatmul.f32.gmra.mxu0 %v174
    %v212 = vpop.f32.mrf.mxu0
    %v213 = vadd.f32 %v193, %v212
    %214 = vdwg.mxu0
    %215 = vst [vmem:[#allocation10] sm:$0xff] %v213
    %v216 = vld [vmem:[#allocation8] sm:$0xff]
    %v217 = vld [vmem:[#allocation8 + $0x8] sm:$0xff]
    %v218 = vld [vmem:[#allocation8 + $0x10] sm:$0xff]
    %v219 = vld [vmem:[#allocation8 + $0x18] sm:$0xff]
    %v220 = vld [vmem:[#allocation8 + $0x20] sm:$0xff]
    %v221 = vld [vmem:[#allocation8 + $0x28] sm:$0xff]
    %v222 = vld [vmem:[#allocation8 + $0x30] sm:$0xff]
    %v223 = vld [vmem:[#allocation8 + $0x38] sm:$0xff]
    %v224 = vld [vmem:[#allocation8 + $0x40] sm:$0xff]
    %v225 = vld [vmem:[#allocation8 + $0x48] sm:$0xff]
    %v226 = vld [vmem:[#allocation8 + $0x50] sm:$0xff]
    %v227 = vld [vmem:[#allocation8 + $0x58] sm:$0xff]
    %v228 = vld [vmem:[#allocation8 + $0x60] sm:$0xff]
    %v229 = vld [vmem:[#allocation8 + $0x68] sm:$0xff]
    %v230 = vld [vmem:[#allocation8 + $0x70] sm:$0xff]
    %v231 = vld [vmem:[#allocation8 + $0x78] sm:$0xff]
    %v232 = vld [vmem:[%s8] sm:$0x1]
    %v234 = vperm.slane %v232, 0
    %236 = vmatpush.msra.mxu0 %v231
    %237 = vmatpush.msra.mxu0 %v230
    %238 = vmatpush.msra.mxu0 %v229
    %239 = vmatpush.msra.mxu0 %v228
    %240 = vmatpush.msra.mxu0 %v227
    %241 = vmatpush.msra.mxu0 %v226
    %242 = vmatpush.msra.mxu0 %v225
    %243 = vmatpush.msra.mxu0 %v224
    %244 = vmatpush.msra.mxu0 %v223
    %245 = vmatpush.msra.mxu0 %v222
    %246 = vmatpush.msra.mxu0 %v221
    %247 = vmatpush.msra.mxu0 %v220
    %248 = vmatpush.msra.mxu0 %v219
    %249 = vmatpush.msra.mxu0 %v218
    %250 = vmatpush.msra.mxu0 %v217
    %251 = vmatpush.msra.mxu0 %v216
    %252 = vmatmul.f32.gmra.mxu0 %v213
    %v253 = vpop.f32.mrf.mxu0
    %v254 = vadd.f32 %v234, %v253
    %255 = vdwg.mxu0
    %256 = vst [vmem:[#allocation11] sm:$0xff] %v254
    // Predicated region
    $region54: #{tpu_custom_call.1} parent=1 // pred_check
      _
    $region55: #{tpu_custom_call.1} parent=1 // pred_check_branch
      %258 = sbr.rel (0) target = $region57
    $region56: #{tpu_custom_call.1} parent=1 // pred_region
      %260 = vsyncadd [#allocation4], 0
      %s262 = sshll.u32 [#allocation10], 4
      %s263 = int_to_ptr.vmem [resolvable:$true] %s262
      %s264 = sshll.u32 %s9, 4
      %s265 = int_to_ptr.hbm [resolvable:$true] %s264
      %267 = dma.vmem_to_hbm [thread:$0]  %s263, 128, %s265, [#allocation4]
    $region57: #{tpu_custom_call.1} parent=1 // pred_fallthru
      _
    // Predicated region
    $region58: #{tpu_custom_call.1} parent=1 // pred_check
      _
    $region59: #{tpu_custom_call.1} parent=1 // pred_check_branch
      %269 = sbr.rel (0) target = $region61
    $region60: #{tpu_custom_call.1} parent=1 // pred_region
      %271 = vsyncadd [#allocation12], 0
      %s273 = sshll.u32 [#allocation11], 4
      %s274 = int_to_ptr.vmem [resolvable:$true] %s273
      %s275 = sshll.u32 %s10, 4
      %s276 = int_to_ptr.hbm [resolvable:$true] %s275
      %278 = dma.vmem_to_hbm [thread:$0]  %s274, 128, %s276, [#allocation12]
    $region61: #{tpu_custom_call.1} parent=1 // pred_fallthru
      _
    // Predicated region
    $region62: #{tpu_custom_call.1} parent=1 // pred_check
      _
    $region63: #{tpu_custom_call.1} parent=1 // pred_check_branch
      %280 = sbr.rel (0) target = $region65
    $region64: #{tpu_custom_call.1} parent=1 // pred_region
      %282 = dma.done [#allocation4], 128
    $region65: #{tpu_custom_call.1} parent=1 // pred_fallthru
      _
    // Predicated region
    $region66: #{tpu_custom_call.1} parent=1 // pred_check
      _
    $region67: #{tpu_custom_call.1} parent=1 // pred_check_branch
      %284 = sbr.rel (0) target = $region69
    $region68: #{tpu_custom_call.1} parent=1 // pred_region
      %286 = dma.done [#allocation12], 128
    $region69: #{tpu_custom_call.1} parent=1 // pred_fallthru
      _
    %287 = vsyncpa [#allocation3], 1
    %288 = vsyncpa [#allocation6], 1
    %289 = vsyncpa [#allocation9], 1
    %290 = vsyncpa [#allocation4], 1
    %291 = vsyncpa [#allocation12], 1

</llo_original>
